<compile_context>
chip_gen: v5e
topology: v5e:2x2
jax: 0.10.0
libtpu: 0.0.40
codegen_flags: <defaults>
</compile_context>

<pallas_src>
import functools

import jax
import jax.numpy as jnp
from jax import lax
from jax.experimental import pallas as pl
from jax.experimental.pallas import tpu as pltpu

_LANES = 128
_BLOCK_ROWS = 2048  # 2048 * 128 * 4B = 1 MiB per f32 buffer


def _srl(h, shift):
    """Logical right shift on int32 (arithmetic shift + mask of sign-extended bits)."""
    return (h >> shift) & ((1 << (32 - shift)) - 1)


def _noise_kernel(seed_ref, x_ref, o_ref, *, sigma):
    pid = pl.program_id(0)
    rows, cols = x_ref.shape
    block_elems = rows * cols

    # Global element index for every element of this block (int32; wraps for >2^31
    # element tensors, which is fine for noise purposes).
    row_ids = lax.broadcasted_iota(jnp.int32, (rows, cols), 0)
    col_ids = lax.broadcasted_iota(jnp.int32, (rows, cols), 1)
    idx = pid * block_elems + row_ids * cols + col_ids

    # Mix the seed in with a golden-ratio stride, then murmur3 fmix32 avalanche.
    # (int32 two's-complement literals for the uint32 constants; mul wraps.)
    h = idx ^ (seed_ref[0] * jnp.int32(-1640531527))   # 0x9E3779B9
    h = h ^ _srl(h, 16)
    h = h * jnp.int32(-2048144789)                     # 0x85EBCA6B
    h = h ^ _srl(h, 13)
    h = h * jnp.int32(-1028477387)                     # 0xC2B2AE35
    h = h ^ _srl(h, 16)

    # 24 well-mixed bits -> uniform u in (0, 1), strictly inside the open interval.
    m = h & 0xFFFFFF
    u = (m.astype(jnp.float32) + jnp.float32(0.5)) * jnp.float32(1.0 / 16777216.0)
    # Inverse-CDF Gaussian: z ~ N(0, 1).
    z = jnp.float32(1.4142135623730951) * lax.erf_inv(2.0 * u - 1.0)

    y = x_ref[...].astype(jnp.float32) + z * jnp.float32(sigma)
    o_ref[...] = y.astype(o_ref.dtype)


def weight_additive_gaussian_noise(
    x: jax.Array,
    *,
    sigma: float,
    seed: int,
    enabled: bool = True,
    training: bool = True,
) -> jax.Array:
    """JAX/Pallas equivalent of WeightAdditiveGaussianNoiseLayer.forward."""
    assert sigma >= 0.0, f"sigma must be non-negative, but got {sigma}"
    if (not enabled) or (not training) or (x is None) or sigma == 0.0:
        return x

    orig_shape = x.shape
    orig_dtype = x.dtype
    n = int(x.size)
    if n == 0:
        return x

    flat = x.reshape(-1)
    rem = n % _LANES
    padded = rem != 0
    if padded:
        # Rare for weight tensors; pad only up to the next lane multiple.
        flat = jnp.pad(flat, (0, _LANES - rem))
    rows = flat.shape[0] // _LANES
    x2d = flat.reshape(rows, _LANES)

    # Large tile for the row axis; full-extent if the tensor is small.  Partial last
    # blocks (rows % block_rows != 0) are handled by Pallas edge masking.
    block_rows = rows if rows <= _BLOCK_ROWS else _BLOCK_ROWS
    grid = (pl.cdiv(rows, block_rows),)

    seed_arr = jnp.asarray([seed], dtype=jnp.int32)

    out2d = pl.pallas_call(
        functools.partial(_noise_kernel, sigma=float(sigma)),
        out_shape=jax.ShapeDtypeStruct((rows, _LANES), orig_dtype),
        grid_spec=pltpu.PrefetchScalarGridSpec(
            num_scalar_prefetch=1,
            grid=grid,
            in_specs=[pl.BlockSpec((block_rows, _LANES), lambda i, s_ref: (i, 0))],
            out_specs=pl.BlockSpec((block_rows, _LANES), lambda i, s_ref: (i, 0)),
        ),
        compiler_params=pltpu.CompilerParams(
            dimension_semantics=("parallel",),
        ),
    )(seed_arr, x2d)

    out = out2d.reshape(-1)
    if padded:
        out = out[:n]
    return out.reshape(orig_shape)


if __name__ == "__main__":
    key = jax.random.PRNGKey(0)
    # Weight-like tensor (the module accepts any tensor shape).
    x = jax.random.normal(key, (2, 4, 16, 16), dtype=jnp.float32)
    sigma = 0.1

    # Enabled + training: noise path (the Pallas kernel).
    y = weight_additive_gaussian_noise(x, sigma=sigma, seed=42, enabled=True, training=True)
    y = jax.block_until_ready(y)
    assert y.shape == x.shape and y.dtype == x.dtype

    # Sanity: the added noise should be non-zero, ~zero-mean, std ~ sigma.
    diff = y - x
    assert float(jnp.max(jnp.abs(diff))) > 0.0
    assert abs(float(jnp.mean(diff))) < 0.02
    assert abs(float(jnp.std(diff)) - sigma) < 0.05

    # Determinism: same seed -> same noise.
    y2 = weight_additive_gaussian_noise(x, sigma=sigma, seed=42, enabled=True, training=True)
    y2 = jax.block_until_ready(y2)
    assert bool(jnp.all(y2 == y))

    # Ragged size (numel not a multiple of 128) exercises the pad/mask path.
    x_r = jax.random.normal(jax.random.PRNGKey(1), (3, 5, 7), dtype=jnp.float32)
    y_r = weight_additive_gaussian_noise(x_r, sigma=sigma, seed=7, enabled=True, training=True)
    y_r = jax.block_until_ready(y_r)
    assert y_r.shape == x_r.shape and y_r.dtype == x_r.dtype
    assert bool(jnp.all(jnp.isfinite(y_r)))

    # Disabled (or eval mode): identity path.
    y_id = weight_additive_gaussian_noise(x, sigma=sigma, seed=42, enabled=False, training=True)
    y_id = jax.block_until_ready(y_id)
    assert bool(jnp.all(y_id == x))

    # sigma == 0: identity early-out.
    y_zero = weight_additive_gaussian_noise(x, sigma=0.0, seed=42, enabled=True, training=True)
    assert bool(jnp.all(y_zero == x))

    print("KERNEL_OK")
</pallas_src>

<mosaic_0001>
module attributes {stable_mosaic.version = 11 : i64} {
  func.func @_noise_kernel(%arg0: i32, %arg1: memref<1xi32, #tpu.memory_space<smem>>, %arg2: memref<16x128xf32, #tpu.memory_space<vmem>>, %arg3: memref<16x128xf32, #tpu.memory_space<vmem>>) attributes {dimension_semantics = [#tpu.dimension_semantics<parallel>], iteration_bounds = array<i64: 1>, scalar_prefetch = 1 : i64, scratch_operands = 0 : i64, tpu.core_type = #tpu.core_type<tc>, window_params = [{transform_indices = @transform_0, window_bounds = array<i64: 16, 128>}, {transform_indices = @transform_1, window_bounds = array<i64: 16, 128>}]} {
    %0 = tpu.iota {dimensions = array<i32: 0>} : vector<16x128xi32>
    %1 = tpu.iota {dimensions = array<i32: 1>} : vector<16x128xi32>
    %c2048_i32 = arith.constant 2048 : i32
    %2 = arith.muli %arg0, %c2048_i32 : i32
    %c128_i32 = arith.constant 128 : i32
    %3 = vector.broadcast %c128_i32 : i32 to vector<16x128xi32>
    %4 = arith.muli %0, %3 : vector<16x128xi32>
    %5 = vector.broadcast %2 : i32 to vector<16x128xi32>
    %6 = arith.addi %5, %4 : vector<16x128xi32>
    %7 = arith.addi %6, %1 : vector<16x128xi32>
    %c0 = arith.constant 0 : index
    %8 = memref.load %arg1[%c0] : memref<1xi32, #tpu.memory_space<smem>>
    %c-1640531527_i32 = arith.constant -1640531527 : i32
    %9 = arith.muli %8, %c-1640531527_i32 : i32
    %10 = vector.broadcast %9 : i32 to vector<16x128xi32>
    %11 = arith.xori %7, %10 : vector<16x128xi32>
    %c16_i32 = arith.constant 16 : i32
    %12 = vector.broadcast %c16_i32 : i32 to vector<16x128xi32>
    %13 = arith.shrsi %11, %12 : vector<16x128xi32>
    %c65535_i32 = arith.constant 65535 : i32
    %14 = vector.broadcast %c65535_i32 : i32 to vector<16x128xi32>
    %15 = arith.andi %13, %14 : vector<16x128xi32>
    %16 = arith.xori %11, %15 : vector<16x128xi32>
    %c-2048144789_i32 = arith.constant -2048144789 : i32
    %17 = vector.broadcast %c-2048144789_i32 : i32 to vector<16x128xi32>
    %18 = arith.muli %16, %17 : vector<16x128xi32>
    %c13_i32 = arith.constant 13 : i32
    %19 = vector.broadcast %c13_i32 : i32 to vector<16x128xi32>
    %20 = arith.shrsi %18, %19 : vector<16x128xi32>
    %c524287_i32 = arith.constant 524287 : i32
    %21 = vector.broadcast %c524287_i32 : i32 to vector<16x128xi32>
    %22 = arith.andi %20, %21 : vector<16x128xi32>
    %23 = arith.xori %18, %22 : vector<16x128xi32>
    %c-1028477387_i32 = arith.constant -1028477387 : i32
    %24 = vector.broadcast %c-1028477387_i32 : i32 to vector<16x128xi32>
    %25 = arith.muli %23, %24 : vector<16x128xi32>
    %c16_i32_0 = arith.constant 16 : i32
    %26 = vector.broadcast %c16_i32_0 : i32 to vector<16x128xi32>
    %27 = arith.shrsi %25, %26 : vector<16x128xi32>
    %c65535_i32_1 = arith.constant 65535 : i32
    %28 = vector.broadcast %c65535_i32_1 : i32 to vector<16x128xi32>
    %29 = arith.andi %27, %28 : vector<16x128xi32>
    %30 = arith.xori %25, %29 : vector<16x128xi32>
    %c16777215_i32 = arith.constant 16777215 : i32
    %31 = vector.broadcast %c16777215_i32 : i32 to vector<16x128xi32>
    %32 = arith.andi %30, %31 : vector<16x128xi32>
    %33 = arith.sitofp %32 : vector<16x128xi32> to vector<16x128xf32>
    %cst = arith.constant 5.000000e-01 : f32
    %34 = vector.broadcast %cst : f32 to vector<16x128xf32>
    %35 = arith.addf %33, %34 : vector<16x128xf32>
    %cst_2 = arith.constant 5.96046448E-8 : f32
    %36 = vector.broadcast %cst_2 : f32 to vector<16x128xf32>
    %37 = arith.mulf %35, %36 : vector<16x128xf32>
    %cst_3 = arith.constant 2.000000e+00 : f32
    %38 = vector.broadcast %cst_3 : f32 to vector<16x128xf32>
    %39 = arith.mulf %38, %37 : vector<16x128xf32>
    %cst_4 = arith.constant 1.000000e+00 : f32
    %40 = vector.broadcast %cst_4 : f32 to vector<16x128xf32>
    %41 = arith.subf %39, %40 : vector<16x128xf32>
    %cst_5 = arith.constant 0.000000e+00 : f32
    %42 = vector.broadcast %cst_5 : f32 to vector<16x128xf32>
    %43 = arith.subf %42, %41 : vector<16x128xf32>
    %44 = arith.mulf %41, %43 : vector<16x128xf32>
    %45 = math.log1p %44 : vector<16x128xf32>
    %cst_6 = arith.constant 0.000000e+00 : f32
    %46 = vector.broadcast %cst_6 : f32 to vector<16x128xf32>
    %47 = arith.subf %46, %45 : vector<16x128xf32>
    %cst_7 = arith.constant 5.000000e+00 : f32
    %48 = vector.broadcast %cst_7 : f32 to vector<16x128xf32>
    %49 = arith.cmpf olt, %47, %48 : vector<16x128xf32>
    %cst_8 = arith.constant 2.500000e+00 : f32
    %50 = vector.broadcast %cst_8 : f32 to vector<16x128xf32>
    %51 = arith.subf %47, %50 : vector<16x128xf32>
    %52 = math.sqrt %47 : vector<16x128xf32>
    %cst_9 = arith.constant 3.000000e+00 : f32
    %53 = vector.broadcast %cst_9 : f32 to vector<16x128xf32>
    %54 = arith.subf %52, %53 : vector<16x128xf32>
    %55 = arith.select %49, %51, %54 : vector<16x128xi1>, vector<16x128xf32>
    %cst_10 = arith.constant 2.81022636E-8 : f32
    %cst_11 = arith.constant -2.00214257E-4 : f32
    %56 = vector.broadcast %cst_10 : f32 to vector<16x128xf32>
    %57 = vector.broadcast %cst_11 : f32 to vector<16x128xf32>
    %58 = arith.select %49, %56, %57 : vector<16x128xi1>, vector<16x128xf32>
    %cst_12 = arith.constant 3.43273939E-7 : f32
    %cst_13 = arith.constant 1.00950558E-4 : f32
    %59 = vector.broadcast %cst_12 : f32 to vector<16x128xf32>
    %60 = vector.broadcast %cst_13 : f32 to vector<16x128xf32>
    %61 = arith.select %49, %59, %60 : vector<16x128xi1>, vector<16x128xf32>
    %62 = arith.mulf %58, %55 : vector<16x128xf32>
    %63 = arith.addf %61, %62 : vector<16x128xf32>
    %cst_14 = arith.constant -3.5233877E-6 : f32
    %cst_15 = arith.constant 0.00134934322 : f32
    %64 = vector.broadcast %cst_14 : f32 to vector<16x128xf32>
    %65 = vector.broadcast %cst_15 : f32 to vector<16x128xf32>
    %66 = arith.select %49, %64, %65 : vector<16x128xi1>, vector<16x128xf32>
    %67 = arith.mulf %63, %55 : vector<16x128xf32>
    %68 = arith.addf %66, %67 : vector<16x128xf32>
    %cst_16 = arith.constant -4.39150654E-6 : f32
    %cst_17 = arith.constant -0.00367342844 : f32
    %69 = vector.broadcast %cst_16 : f32 to vector<16x128xf32>
    %70 = vector.broadcast %cst_17 : f32 to vector<16x128xf32>
    %71 = arith.select %49, %69, %70 : vector<16x128xi1>, vector<16x128xf32>
    %72 = arith.mulf %68, %55 : vector<16x128xf32>
    %73 = arith.addf %71, %72 : vector<16x128xf32>
    %cst_18 = arith.constant 2.1858087E-4 : f32
    %cst_19 = arith.constant 0.00573950773 : f32
    %74 = vector.broadcast %cst_18 : f32 to vector<16x128xf32>
    %75 = vector.broadcast %cst_19 : f32 to vector<16x128xf32>
    %76 = arith.select %49, %74, %75 : vector<16x128xi1>, vector<16x128xf32>
    %77 = arith.mulf %73, %55 : vector<16x128xf32>
    %78 = arith.addf %76, %77 : vector<16x128xf32>
    %cst_20 = arith.constant -0.00125372503 : f32
    %cst_21 = arith.constant -0.0076224613 : f32
    %79 = vector.broadcast %cst_20 : f32 to vector<16x128xf32>
    %80 = vector.broadcast %cst_21 : f32 to vector<16x128xf32>
    %81 = arith.select %49, %79, %80 : vector<16x128xi1>, vector<16x128xf32>
    %82 = arith.mulf %78, %55 : vector<16x128xf32>
    %83 = arith.addf %81, %82 : vector<16x128xf32>
    %cst_22 = arith.constant -0.00417768164 : f32
    %cst_23 = arith.constant 0.00943887047 : f32
    %84 = vector.broadcast %cst_22 : f32 to vector<16x128xf32>
    %85 = vector.broadcast %cst_23 : f32 to vector<16x128xf32>
    %86 = arith.select %49, %84, %85 : vector<16x128xi1>, vector<16x128xf32>
    %87 = arith.mulf %83, %55 : vector<16x128xf32>
    %88 = arith.addf %86, %87 : vector<16x128xf32>
    %cst_24 = arith.constant 0.246640727 : f32
    %cst_25 = arith.constant 1.00167406 : f32
    %89 = vector.broadcast %cst_24 : f32 to vector<16x128xf32>
    %90 = vector.broadcast %cst_25 : f32 to vector<16x128xf32>
    %91 = arith.select %49, %89, %90 : vector<16x128xi1>, vector<16x128xf32>
    %92 = arith.mulf %88, %55 : vector<16x128xf32>
    %93 = arith.addf %91, %92 : vector<16x128xf32>
    %cst_26 = arith.constant 1.50140941 : f32
    %cst_27 = arith.constant 2.83297682 : f32
    %94 = vector.broadcast %cst_26 : f32 to vector<16x128xf32>
    %95 = vector.broadcast %cst_27 : f32 to vector<16x128xf32>
    %96 = arith.select %49, %94, %95 : vector<16x128xi1>, vector<16x128xf32>
    %97 = arith.mulf %93, %55 : vector<16x128xf32>
    %98 = arith.addf %96, %97 : vector<16x128xf32>
    %99 = math.absf %41 : vector<16x128xf32>
    %cst_28 = arith.constant 1.000000e+00 : f32
    %100 = vector.broadcast %cst_28 : f32 to vector<16x128xf32>
    %101 = arith.cmpf oeq, %99, %100 : vector<16x128xf32>
    %cst_29 = arith.constant 0x7F800000 : f32
    %102 = vector.broadcast %cst_29 : f32 to vector<16x128xf32>
    %103 = arith.mulf %102, %41 : vector<16x128xf32>
    %104 = arith.mulf %98, %41 : vector<16x128xf32>
    %105 = arith.select %101, %103, %104 : vector<16x128xi1>, vector<16x128xf32>
    %cst_30 = arith.constant 1.41421354 : f32
    %106 = vector.broadcast %cst_30 : f32 to vector<16x128xf32>
    %107 = arith.mulf %106, %105 : vector<16x128xf32>
    %c0_31 = arith.constant 0 : index
    %c0_32 = arith.constant 0 : index
    %108 = vector.load %arg2[%c0_31, %c0_32] : memref<16x128xf32, #tpu.memory_space<vmem>>, vector<16x128xf32>
    %cst_33 = arith.constant 1.000000e-01 : f32
    %109 = vector.broadcast %cst_33 : f32 to vector<16x128xf32>
    %110 = arith.mulf %107, %109 : vector<16x128xf32>
    %111 = arith.addf %108, %110 : vector<16x128xf32>
    %c0_34 = arith.constant 0 : index
    %c0_35 = arith.constant 0 : index
    %112 = vector.load %arg3[%c0_34, %c0_35] : memref<16x128xf32, #tpu.memory_space<vmem>>, vector<16x128xf32>
    tpu.vector_store %arg3[%c0_34, %c0_35], %111 {strides = array<i32>} : memref<16x128xf32, #tpu.memory_space<vmem>>, vector<16x128xf32>,
    return
  }
  func.func @transform_0(%arg0: i32, %arg1: memref<1xi32, #tpu.memory_space<smem>>) -> (i32, i32) {
    %c0_i32 = arith.constant 0 : i32
    %c0_i32_0 = arith.constant 0 : i32
    return %arg0, %c0_i32 : i32, i32
  }
  func.func @transform_1(%arg0: i32, %arg1: memref<1xi32, #tpu.memory_space<smem>>) -> (i32, i32) {
    %c0_i32 = arith.constant 0 : i32
    %c0_i32_0 = arith.constant 0 : i32
    return %arg0, %c0_i32 : i32, i32
  }
}

</mosaic_0001>

<llo_original>
// kernel: tpu_custom_call.1
$region0: #{tpu_custom_call.1}
  #allocation0 [shape = 'u32[]', space=smem, size = 0x4, offset = 0x4, fixed_abs, tag = 'smem constant byte address 0x4 - core index']
  #allocation1 [shape = 'u32[72,128]{1,0:T(1,128)}', space=vmem, size = 0x9000, scoped, tag = 'internal scratch']
  #allocation2 [shape = 's32[1]{0}', space=sflag, size = 0x4, scoped, tag = 'scoped memory for tpu_custom_call.1']
  #allocation3 [shape = 's32[1]{0:T(128)S(6)}', space=smem, size = 0x200, scoped, tag = 'prefetched SMEM operand 0']
  %s0 = inlined_call_operand.<no memory space> [shape: s32[1], index: 0, kind: input, shape index: {}]
  %s1 = inlined_call_operand.hbm [shape: f32[16,128], index: 1, kind: input, shape index: {}]
  %s2 = inlined_call_operand.hbm [shape: f32[16,128], index: 2, kind: output, shape index: {}]
  %s3 = sld [smem:[#allocation0]]
  $region18: #{tpu_custom_call.1} parent=0
    _
  %s5 = ssub.s32 1, %s3
  %s6 = scalar_select 0, %s5, %s3
  %7 = sst [smem:[#allocation3]] %s0
  $region1: #{tpu_custom_call.1} parent=0
    #allocation4 [shape = 'u8[8192]{0}', space=vmem, size = 0x2000, scoped, tag = 'input window, operand 1, single buffered']
    #allocation5 [shape = 's32[1]{0}', space=sflag, size = 0x4, scoped, tag = 'scoped memory for tpu_custom_call.1']
    #allocation6 [shape = 's32[1]{0}', space=sflag, size = 0x4, scoped, tag = 'scoped memory for tpu_custom_call.1']
    #allocation7 [shape = 'u8[8192]{0}', space=vmem, size = 0x2000, scoped, tag = 'output window, operand 0, single buffered']
    %8 = vsyncpa [#allocation5], 0
    %9 = vsyncpa [#allocation6], 0
    // Predicated region
    $region2: #{tpu_custom_call.1} parent=1 // pred_check
      _
    $region3: #{tpu_custom_call.1} parent=1 // pred_check_branch
      %11 = sbr.rel (0) target = $region5
    $region4: #{tpu_custom_call.1} parent=1 // pred_region
      %13 = vsyncadd [#allocation5], 0
      %s14 = sshll.u32 %s1, 4
      %s15 = int_to_ptr.hbm [resolvable:$true] %s14
      %s16 = sshll.u32 [#allocation4], 4
      %s17 = int_to_ptr.vmem [resolvable:$true] %s16
      %22 = dma.hbm_to_vmem [thread:$0]  %s15, 256, %s17, [#allocation5], 128, 128, 8
    $region5: #{tpu_custom_call.1} parent=1 // pred_fallthru
      _
    // Predicated region
    $region6: #{tpu_custom_call.1} parent=1 // pred_check
      _
    $region7: #{tpu_custom_call.1} parent=1 // pred_check_branch
      %24 = sbr.rel (0) target = $region9
    $region8: #{tpu_custom_call.1} parent=1 // pred_region
      %26 = dma.done [#allocation5], 256
    $region9: #{tpu_custom_call.1} parent=1 // pred_fallthru
      _
    %v27 = vlaneseq
    %v28 = vshrl.u32 %v27, 7
    %v29 = vadd.s32 %v28, 8
    %v30 = vlaneseq
    %v31 = vand.u32 %v30, 127
    %s32 = smul.u32 0, 2048
    %v33 = vmul.u32 %v28, 128
    %v34 = vmul.u32 %v29, 128
    %v35 = vstv %s32
    %v36 = vadd.s32 %v35, %v33
    %v37 = vadd.s32 %v35, %v34
    %v38 = vadd.s32 %v36, %v31
    %v39 = vadd.s32 %v37, %v31
    %s40 = sld [smem:[#allocation3]]
    %s41 = smul.u32 %s40, 2654435769
    %v42 = vstv %s41
    %v43 = vxor.u32 %v38, %v42
    %v44 = vxor.u32 %v39, %v42
    %v45 = vshra.s32 %v43, 16
    %v46 = vshra.s32 %v44, 16
    %v47 = vand.u32 %v45, 65535
    %v48 = vand.u32 %v46, 65535
    %v49 = vxor.u32 %v43, %v47
    %v50 = vxor.u32 %v44, %v48
    %v51 = vmul.u32 %v49, 2246822507
    %v52 = vmul.u32 %v50, 2246822507
    %v53 = vshra.s32 %v51, 13
    %v54 = vshra.s32 %v52, 13
    %v55 = vand.u32 %v53, 524287
    %v56 = vand.u32 %v54, 524287
    %v57 = vxor.u32 %v51, %v55
    %v58 = vxor.u32 %v52, %v56
    %v59 = vmul.u32 %v57, 3266489909
    %v60 = vmul.u32 %v58, 3266489909
    %v61 = vshra.s32 %v59, 16
    %v62 = vshra.s32 %v60, 16
    %v63 = vand.u32 %v61, 65535
    %v64 = vand.u32 %v62, 65535
    %v65 = vxor.u32 %v59, %v63
    %v66 = vxor.u32 %v60, %v64
    %v67 = vand.u32 %v65, 16777215
    %v68 = vand.u32 %v66, 16777215
    %v69 = vcvt.s32.f32 %v67
    %v70 = vcvt.s32.f32 %v68
    %v71 = vadd.f32 %v69, 0.5
    %v72 = vadd.f32 %v70, 0.5
    %v73 = vmul.f32 %v71, 5.9604645e-08
    %v74 = vmul.f32 %v72, 5.9604645e-08
    %v75 = vmul.f32 %v73, 2.0
    %v76 = vmul.f32 %v74, 2.0
    %v77 = vsub.f32 %v75, 1.0
    %v78 = vsub.f32 %v76, 1.0
    %v79 = vsub.f32 0.0, %v77
    %v80 = vsub.f32 0.0, %v78
    %v81 = vmul.f32 %v77, %v79
    %v82 = vmul.f32 %v78, %v80
    %v83 = vadd.f32 %v81, 1.0
    %v84 = vlog2.pop %v83
    %v85 = vmul.f32 %v84, 0.6931472
    %v86 = vmul.f32 -0.5, %v81
    %v87 = vadd.f32 %v86, 1.0
    %v88 = vmul.f32 %v87, %v81
    %v89 = vand.u32 2147483647, %v81
    %vm90 = vcmp.lt.f32.partialorder %v89, 0.0004427343
    %v91 = vsel %vm90, %v88, %v85
    %v92 = vadd.f32 %v82, 1.0
    %v93 = vlog2.pop %v92
    %v94 = vmul.f32 %v93, 0.6931472
    %v95 = vmul.f32 -0.5, %v82
    %v96 = vadd.f32 %v95, 1.0
    %v97 = vmul.f32 %v96, %v82
    %v98 = vand.u32 2147483647, %v82
    %vm99 = vcmp.lt.f32.partialorder %v98, 0.0004427343
    %v100 = vsel %vm99, %v97, %v94
    %v101 = vsub.f32 0.0, %v91
    %v102 = vsub.f32 0.0, %v100
    %vm103 = vcmp.lt.f32.partialorder %v101, 5.0
    %vm104 = vcmp.lt.f32.partialorder %v102, 5.0
    %v105 = vsub.f32 %v101, 2.5
    %v106 = vsub.f32 %v102, 2.5
    %v107 = vrsqrt.pop %v101
    %v108 = vmul.f32 %v107, %v101
    %v109 = vmul.f32 %v108, %v107
    %v110 = vmul.f32 0.5, %v109
    %v111 = vsub.f32 1.5, %v110
    %v112 = vmul.f32 %v107, %v111
    %v113 = vmul.f32 %v101, %v112
    %vm114 = vcmp.eq.f32.partialorder %v101, inf
    %v115 = vsel %vm114, %v101, %v113
    %vm116 = vcmp.eq.f32.partialorder %v101, 0.0
    %v117 = vand.u32 %v101, 2147483648
    %v118 = vsel %vm116, %v117, %v115
    %v119 = vrsqrt.pop %v102
    %v120 = vmul.f32 %v119, %v102
    %v121 = vmul.f32 %v120, %v119
    %v122 = vmul.f32 0.5, %v121
    %v123 = vsub.f32 1.5, %v122
    %v124 = vmul.f32 %v119, %v123
    %v125 = vmul.f32 %v102, %v124
    %vm126 = vcmp.eq.f32.partialorder %v102, inf
    %v127 = vsel %vm126, %v102, %v125
    %vm128 = vcmp.eq.f32.partialorder %v102, 0.0
    %v129 = vand.u32 %v102, 2147483648
    %v130 = vsel %vm128, %v129, %v127
    %v131 = vsub.f32 %v118, 3.0
    %v132 = vsub.f32 %v130, 3.0
    %v133 = vsel %vm103, %v105, %v131
    %v134 = vsel %vm104, %v106, %v132
    %v135 = vsel %vm103, 2.8102264e-08, -0.00020021426
    %v136 = vsel %vm104, 2.8102264e-08, -0.00020021426
    %v137 = vsel %vm103, 3.4327394e-07, 0.00010095056
    %v138 = vsel %vm104, 3.4327394e-07, 0.00010095056
    %v139 = vmul.f32 %v135, %v133
    %v140 = vmul.f32 %v136, %v134
    %v141 = vadd.f32 %v137, %v139
    %v142 = vadd.f32 %v138, %v140
    %v143 = vsel %vm103, -3.5233877e-06, 0.0013493432
    %v144 = vsel %vm104, -3.5233877e-06, 0.0013493432
    %v145 = vmul.f32 %v141, %v133
    %v146 = vmul.f32 %v142, %v134
    %v147 = vadd.f32 %v143, %v145
    %v148 = vadd.f32 %v144, %v146
    %v149 = vsel %vm103, -4.3915065e-06, -0.0036734284
    %v150 = vsel %vm104, -4.3915065e-06, -0.0036734284
    %v151 = vmul.f32 %v147, %v133
    %v152 = vmul.f32 %v148, %v134
    %v153 = vadd.f32 %v149, %v151
    %v154 = vadd.f32 %v150, %v152
    %v155 = vsel %vm103, 0.00021858087, 0.0057395077
    %v156 = vsel %vm104, 0.00021858087, 0.0057395077
    %v157 = vmul.f32 %v153, %v133
    %v158 = vmul.f32 %v154, %v134
    %v159 = vadd.f32 %v155, %v157
    %v160 = vadd.f32 %v156, %v158
    %v161 = vsel %vm103, -0.001253725, -0.0076224613
    %v162 = vsel %vm104, -0.001253725, -0.0076224613
    %v163 = vmul.f32 %v159, %v133
    %v164 = vmul.f32 %v160, %v134
    %v165 = vadd.f32 %v161, %v163
    %v166 = vadd.f32 %v162, %v164
    %v167 = vsel %vm103, -0.0041776816, 0.0094388705
    %v168 = vsel %vm104, -0.0041776816, 0.0094388705
    %v169 = vmul.f32 %v165, %v133
    %v170 = vmul.f32 %v166, %v134
    %v171 = vadd.f32 %v167, %v169
    %v172 = vadd.f32 %v168, %v170
    %v173 = vsel %vm103, 0.24664073, 1.001674
    %v174 = vsel %vm104, 0.24664073, 1.001674
    %v175 = vmul.f32 %v171, %v133
    %v176 = vmul.f32 %v172, %v134
    %v177 = vadd.f32 %v173, %v175
    %v178 = vadd.f32 %v174, %v176
    %v179 = vsel %vm103, 1.5014094, 2.8329768
    %v180 = vsel %vm104, 1.5014094, 2.8329768
    %v181 = vmul.f32 %v177, %v133
    %v182 = vmul.f32 %v178, %v134
    %v183 = vadd.f32 %v179, %v181
    %v184 = vadd.f32 %v180, %v182
    %v185 = vand.u32 2147483647, %v77
    %v186 = vand.u32 2147483647, %v78
    %vm187 = vcmp.eq.f32.partialorder %v185, 1.0
    %vm188 = vcmp.eq.f32.partialorder %v186, 1.0
    %v189 = vmul.f32 %v77, inf
    %v190 = vmul.f32 %v78, inf
    %v191 = vmul.f32 %v183, %v77
    %v192 = vmul.f32 %v184, %v78
    %v193 = vsel %vm187, %v189, %v191
    %v194 = vsel %vm188, %v190, %v192
    %v195 = vmul.f32 %v193, 1.4142135
    %v196 = vmul.f32 %v194, 1.4142135
    %v197 = vld [vmem:[#allocation4] sm:$0xff]
    %v198 = vld [vmem:[#allocation4 + $0x8] sm:$0xff]
    %v199 = vmul.f32 %v195, 0.1
    %v200 = vmul.f32 %v196, 0.1
    %v201 = vadd.f32 %v197, %v199
    %v202 = vadd.f32 %v198, %v200
    %203 = vst [vmem:[#allocation7] sm:$0xff] %v201
    %204 = vst [vmem:[#allocation7 + $0x8] sm:$0xff] %v202
    // Predicated region
    $region10: #{tpu_custom_call.1} parent=1 // pred_check
      _
    $region11: #{tpu_custom_call.1} parent=1 // pred_check_branch
      %206 = sbr.rel (0) target = $region13
    $region12: #{tpu_custom_call.1} parent=1 // pred_region
      %208 = vsyncadd [#allocation6], 0
      %s209 = sshll.u32 [#allocation7], 4
      %s210 = int_to_ptr.vmem [resolvable:$true] %s209
      %s211 = sshll.u32 %s2, 4
      %s212 = int_to_ptr.hbm [resolvable:$true] %s211
      %217 = dma.vmem_to_hbm [thread:$0]  %s210, 256, %s212, [#allocation6], 128, 128, 8
    $region13: #{tpu_custom_call.1} parent=1 // pred_fallthru
      _
    // Predicated region
    $region14: #{tpu_custom_call.1} parent=1 // pred_check
      _
    $region15: #{tpu_custom_call.1} parent=1 // pred_check_branch
      %219 = sbr.rel (0) target = $region17
    $region16: #{tpu_custom_call.1} parent=1 // pred_region
      %221 = dma.done [#allocation6], 256
    $region17: #{tpu_custom_call.1} parent=1 // pred_fallthru
      _
    %222 = vsyncpa [#allocation5], 1
    %223 = vsyncpa [#allocation6], 1

</llo_original>
